<compile_context>
chip_gen: v5e
topology: v5e:2x2
jax: 0.10.0
libtpu: 0.0.40
codegen_flags: <defaults>
</compile_context>

<pallas_src>
import functools
import math

import jax
import jax.numpy as jnp
from jax.experimental import pallas as pl
from jax.experimental.pallas import tpu as pltpu


_MIN_LANE = 128                      # below this, fixed cost + masked stores dominate
_TARGET_BLOCK_BYTES = 4 * 1024 * 1024  # ~4 MiB per input block (2-8 MiB sweet spot)


def _sublane_pack(dtype) -> int:
    """Rows per packed sublane group: 8 for f32, 16 for bf16, 32 for int8/fp8."""
    itemsize = jnp.dtype(dtype).itemsize
    return 8 * max(1, 4 // itemsize)


def _vmem_capacity_bytes() -> int:
    try:
        return int(pltpu.get_tpu_info().vmem_capacity_bytes)
    except Exception:
        return 64 * 1024 * 1024      # conservative default (v7x per-TC VMEM)


def _pick_rows_tiling(R, D, dtype):
    """Row-tiled (last-dim) kernel: return (block_rows, vmem_limit); 0 -> fallback."""
    itemsize = jnp.dtype(dtype).itemsize
    pack = _sublane_pack(dtype)
    vmem_cap = _vmem_capacity_bytes()
    budget = int(vmem_cap * 0.7)

    # Per-row VMEM: double-buffered in + out blocks (4 x dtype bytes) plus
    # ~2 f32 intermediates (exp result + fused upcast) inside the body.
    per_row_vmem = D * (4 * itemsize + 2 * 4)
    if pack * per_row_vmem > budget:
        # TODO(synk): add a D-tiled online-softmax kernel for very large D.
        return 0, 0

    rows_budget = budget // per_row_vmem
    rows_target = max(pack, _TARGET_BLOCK_BYTES // max(1, D * itemsize))
    block_rows = min(int(rows_budget), int(rows_target))
    block_rows = max(pack, (block_rows // pack) * pack)
    r_ceil = ((R + pack - 1) // pack) * pack
    block_rows = min(block_rows, r_ceil)

    needed = block_rows * per_row_vmem
    vmem_limit = min(int(vmem_cap * 0.9), max(int(needed), 32 * 1024 * 1024))
    return int(block_rows), int(vmem_limit)


def _pick_lane_tiling(D, T, dtype):
    """Middle-axis kernel: return (t_block, vmem_limit); 0 -> fallback."""
    itemsize = jnp.dtype(dtype).itemsize
    vmem_cap = _vmem_capacity_bytes()
    budget = int(vmem_cap * 0.7)

    # Per lane-column VMEM: double-buffered in + out + ~2 f32 intermediates.
    per_lane_vmem = D * (4 * itemsize + 2 * 4)
    if 128 * per_lane_vmem > budget:
        # TODO(synk): tile the softmax axis with an online reduction for huge D.
        return 0, 0

    lanes_budget = budget // per_lane_vmem
    lanes_target = max(128, _TARGET_BLOCK_BYTES // max(1, D * itemsize))
    t_block = min(int(lanes_budget), int(lanes_target))
    t_block = max(128, (t_block // 128) * 128)
    t_ceil = ((T + 127) // 128) * 128
    t_block = min(t_block, t_ceil)

    needed = t_block * per_lane_vmem
    vmem_limit = min(int(vmem_cap * 0.9), max(int(needed), 32 * 1024 * 1024))
    return int(t_block), int(vmem_limit)


def _softmax_lastdim_kernel(x_ref, o_ref):
    # Native-dtype max (exact in bf16); upcast consumed once inside the exp.
    x = x_ref[...]
    m = jnp.max(x, axis=-1, keepdims=True)
    e = jnp.exp(x.astype(jnp.float32) - m.astype(jnp.float32))
    s = jnp.sum(e, axis=-1, keepdims=True)
    o_ref[...] = (e / s).astype(o_ref.dtype)


def _softmax_axis1_kernel(x_ref, o_ref):
    # Block is (1, D, t_block); softmax reduces along the sublane axis (axis=1).
    x = x_ref[...]
    m = jnp.max(x, axis=1, keepdims=True)
    e = jnp.exp(x.astype(jnp.float32) - m.astype(jnp.float32))
    s = jnp.sum(e, axis=1, keepdims=True)
    o_ref[...] = (e / s).astype(o_ref.dtype)


@functools.partial(jax.jit, static_argnames=("block_rows", "vmem_limit"))
def _softmax_lastdim_2d(x2d, block_rows, vmem_limit):
    R, D = x2d.shape
    grid = (pl.cdiv(R, block_rows),)   # partial last block: OOB rows never written
    itemsize = jnp.dtype(x2d.dtype).itemsize
    n = R * D
    cost = pl.CostEstimate(flops=5 * n, transcendentals=n,
                           bytes_accessed=2 * n * itemsize)
    return pl.pallas_call(
        _softmax_lastdim_kernel,
        out_shape=jax.ShapeDtypeStruct((R, D), x2d.dtype),
        grid_spec=pltpu.PrefetchScalarGridSpec(
            num_scalar_prefetch=0,
            grid=grid,
            in_specs=[pl.BlockSpec((block_rows, D), lambda i: (i, 0))],
            out_specs=pl.BlockSpec((block_rows, D), lambda i: (i, 0)),
        ),
        compiler_params=pltpu.CompilerParams(
            # TODO(synk): switch to pltpu.CORE_PARALLEL / pl.core_map once it is
            # verified that plain "parallel" does not split this 1-D grid across
            # v7x's two TensorCores.
            dimension_semantics=("parallel",),
            vmem_limit_bytes=vmem_limit,
        ),
        cost_estimate=cost,
    )(x2d)


@functools.partial(jax.jit, static_argnames=("t_block", "vmem_limit"))
def _softmax_middim_3d(x3d, t_block, vmem_limit):
    R, D, T = x3d.shape
    grid = (R, pl.cdiv(T, t_block))    # partial last lane-block: OOB cols never written
    itemsize = jnp.dtype(x3d.dtype).itemsize
    n = R * D * T
    cost = pl.CostEstimate(flops=5 * n, transcendentals=n,
                           bytes_accessed=2 * n * itemsize)
    return pl.pallas_call(
        _softmax_axis1_kernel,
        out_shape=jax.ShapeDtypeStruct((R, D, T), x3d.dtype),
        grid_spec=pltpu.PrefetchScalarGridSpec(
            num_scalar_prefetch=0,
            grid=grid,
            in_specs=[pl.BlockSpec((1, D, t_block), lambda r, t: (r, 0, t))],
            out_specs=pl.BlockSpec((1, D, t_block), lambda r, t: (r, 0, t)),
        ),
        compiler_params=pltpu.CompilerParams(
            dimension_semantics=("parallel", "parallel"),
            vmem_limit_bytes=vmem_limit,
        ),
        cost_estimate=cost,
    )(x3d)


class FloatSoftmax:
    """JAX/Pallas port of models/quantization_utils/layer_selection.FloatSoftmax.

    dim == last axis      -> row-tiled last-dim kernel (softmax dim on lanes).
    dim == any other axis -> (R, D, T) reshape + axis-1 kernel (softmax dim on
                             sublanes, trailing dims on lanes) -- no transposes.
    Lane-sparse or VMEM-overflowing shapes -> jax.nn.softmax on the same axis.
    """

    def __init__(self, dim=-1, **kwargs):
        self.dim = dim
        # buffer `act_scaling_factor` (unused in forward, kept for parity)
        self.act_scaling_factor = jnp.ones((1,), dtype=jnp.float32)

    def __call__(self, x, scaling_factor=None):
        dim = self.dim
        if dim < 0:
            dim = x.ndim + dim

        shape = x.shape
        out = None

        if x.ndim >= 1 and all(int(s) > 0 for s in shape):
            if dim == x.ndim - 1:
                D = int(shape[-1])
                R = int(math.prod(shape[:-1])) if x.ndim > 1 else 1
                if D >= _MIN_LANE:
                    block_rows, vmem_limit = _pick_rows_tiling(R, D, x.dtype)
                    if block_rows > 0:
                        out2d = _softmax_lastdim_2d(
                            x.reshape(R, D),
                            block_rows=block_rows, vmem_limit=vmem_limit)
                        out = out2d.reshape(shape)
            else:
                D = int(shape[dim])
                R = int(math.prod(shape[:dim])) if dim > 0 else 1
                T = int(math.prod(shape[dim + 1:]))
                if T >= _MIN_LANE:
                    t_block, vmem_limit = _pick_lane_tiling(D, T, x.dtype)
                    if t_block > 0:
                        out3d = _softmax_middim_3d(
                            x.reshape(R, D, T),
                            t_block=t_block, vmem_limit=vmem_limit)
                        out = out3d.reshape(shape)

        if out is None:
            # Tiny / awkward shapes: plain XLA softmax on the requested axis
            # (no moveaxis round trips).
            out = jax.nn.softmax(x, axis=dim)

        if scaling_factor is None:
            scaling_factor = jnp.ones((1,), dtype=x.dtype)
        return out, scaling_factor

    def fix(self):
        """Match the interface of quantized modules"""
        pass

    def unfix(self):
        """Match the interface of quantized modules"""
        pass


if __name__ == "__main__":
    key = jax.random.PRNGKey(0)
    k1, k2, k3, k4 = jax.random.split(key, 4)

    mod = FloatSoftmax(dim=-1)

    # Last-dim kernel path: lane-dense D=256, 18 rows (not a multiple of the
    # sublane pack) -> exercises the partial last block, no wrapper padding.
    x = jax.random.normal(k1, (2, 9, 256), dtype=jnp.float32)
    out, sf = mod(x)
    out = jax.block_until_ready(out)
    sf = jax.block_until_ready(sf)
    ref = jax.nn.softmax(x, axis=-1)
    assert out.shape == x.shape and out.dtype == x.dtype
    assert sf.shape == (1,) and bool(jnp.all(sf == 1.0))
    assert jnp.allclose(out, ref, atol=1e-5, rtol=1e-5)
    assert jnp.allclose(jnp.sum(out, axis=-1), 1.0, atol=1e-5)

    # Non-last-dim path (dim=1): streams the original layout through the
    # axis-1 kernel -- no moveaxis / transposed HBM copies.
    mod1 = FloatSoftmax(dim=1)
    x_mid = jax.random.normal(k2, (2, 4, 16, 32), dtype=jnp.float32)
    out_m, _ = mod1(x_mid)
    out_m = jax.block_until_ready(out_m)
    ref_m = jax.nn.softmax(x_mid, axis=1)
    assert out_m.shape == x_mid.shape
    assert jnp.allclose(out_m, ref_m, atol=1e-5, rtol=1e-5)

    # bf16 last-dim path: 16-row sublane pack, native-dtype max, f32 exp/sum.
    x_bf = jax.random.normal(k3, (4, 8, 128), dtype=jnp.bfloat16)
    out_bf, _ = mod(x_bf)
    out_bf = jax.block_until_ready(out_bf)
    ref_bf = jax.nn.softmax(x_bf.astype(jnp.float32), axis=-1)
    assert out_bf.dtype == jnp.bfloat16
    assert jnp.allclose(out_bf.astype(jnp.float32), ref_bf, atol=2e-2, rtol=2e-2)

    # Lane-sparse last dim (D=32 < 128): XLA fallback path.
    x_small = jax.random.normal(k4, (2, 4, 16, 32), dtype=jnp.float32)
    out_s, _ = mod(x_small)
    out_s = jax.block_until_ready(out_s)
    assert jnp.allclose(out_s, jax.nn.softmax(x_small, axis=-1),
                        atol=1e-5, rtol=1e-5)

    print("KERNEL_OK")
</pallas_src>

<mosaic_0001>
module attributes {stable_mosaic.version = 11 : i64} {
  func.func @_softmax_lastdim_kernel(%arg0: i32, %arg1: memref<24x256xf32, #tpu.memory_space<vmem>>, %arg2: memref<24x256xf32, #tpu.memory_space<vmem>>) attributes {dimension_semantics = [#tpu.dimension_semantics<parallel>], iteration_bounds = array<i64: 1>, scalar_prefetch = 0 : i64, scratch_operands = 0 : i64, tpu.core_type = #tpu.core_type<tc>, window_params = [{transform_indices = @transform_0, window_bounds = array<i64: 24, 256>}, {transform_indices = @transform_1, window_bounds = array<i64: 24, 256>}]} {
    %c0 = arith.constant 0 : index
    %c0_0 = arith.constant 0 : index
    %0 = vector.load %arg1[%c0, %c0_0] : memref<24x256xf32, #tpu.memory_space<vmem>>, vector<24x256xf32>
    %cst = arith.constant dense<0xFF800000> : vector<24xf32>
    %1 = vector.multi_reduction <maximumf>, %0, %cst [1] : vector<24x256xf32> to vector<24xf32>
    %2 = vector.shape_cast %1 : vector<24xf32> to vector<24x1xf32>
    %3 = vector.broadcast %2 : vector<24x1xf32> to vector<24x256xf32>
    %4 = arith.subf %0, %3 : vector<24x256xf32>
    %5 = math.exp %4 : vector<24x256xf32>
    %cst_1 = arith.constant dense<0.000000e+00> : vector<24xf32>
    %6 = vector.multi_reduction <add>, %5, %cst_1 [1] : vector<24x256xf32> to vector<24xf32>
    %7 = vector.shape_cast %6 : vector<24xf32> to vector<24x1xf32>
    %8 = vector.broadcast %7 : vector<24x1xf32> to vector<24x256xf32>
    %9 = arith.divf %5, %8 : vector<24x256xf32>
    %c0_2 = arith.constant 0 : index
    %c0_3 = arith.constant 0 : index
    %10 = vector.load %arg2[%c0_2, %c0_3] : memref<24x256xf32, #tpu.memory_space<vmem>>, vector<24x256xf32>
    tpu.vector_store %arg2[%c0_2, %c0_3], %9 {strides = array<i32>} : memref<24x256xf32, #tpu.memory_space<vmem>>, vector<24x256xf32>,
    return
  }
  func.func @transform_0(%arg0: i32) -> (i32, i32) {
    %c0_i32 = arith.constant 0 : i32
    %c0_i32_0 = arith.constant 0 : i32
    return %arg0, %c0_i32 : i32, i32
  }
  func.func @transform_1(%arg0: i32) -> (i32, i32) {
    %c0_i32 = arith.constant 0 : i32
    %c0_i32_0 = arith.constant 0 : i32
    return %arg0, %c0_i32 : i32, i32
  }
}

</mosaic_0001>

<llo_original>
// kernel: _softmax_lastdim_2d.1
$region0: #{_softmax_lastdim_2d.1}
  #allocation0 [shape = 'u32[]', space=smem, size = 0x4, offset = 0x4, fixed_abs, tag = 'smem constant byte address 0x4 - core index']
  #allocation1 [shape = 'u32[72,128]{1,0:T(1,128)}', space=vmem, size = 0x9000, scoped, tag = 'internal scratch']
  %s0 = inlined_call_operand.hbm [shape: f32[18,256], index: 0, kind: input, shape index: {}]
  %s1 = inlined_call_operand.hbm [shape: f32[18,256], index: 1, kind: output, shape index: {}]
  %s2 = sld [smem:[#allocation0]]
  $region18: #{_softmax_lastdim_2d.1} parent=0
    _
  %s4 = ssub.s32 1, %s2
  %s5 = scalar_select 0, %s4, %s2
  $region1: #{_softmax_lastdim_2d.1} parent=0
    #allocation2 [shape = 'u8[24576]{0}', space=vmem, size = 0x6000, scoped, tag = 'input window, operand 0, single buffered']
    #allocation3 [shape = 's32[1]{0}', space=sflag, size = 0x4, scoped, tag = 'scoped memory for _softmax_lastdim_2d.1']
    #allocation4 [shape = 's32[1]{0}', space=sflag, size = 0x4, scoped, tag = 'scoped memory for _softmax_lastdim_2d.1']
    #allocation5 [shape = 'u8[24576]{0}', space=vmem, size = 0x6000, scoped, tag = 'output window, operand 0, single buffered']
    %6 = vsyncpa [#allocation3], 0
    %7 = vsyncpa [#allocation4], 0
    // Predicated region
    $region2: #{_softmax_lastdim_2d.1} parent=1 // pred_check
      _
    $region3: #{_softmax_lastdim_2d.1} parent=1 // pred_check_branch
      %9 = sbr.rel (0) target = $region5
    $region4: #{_softmax_lastdim_2d.1} parent=1 // pred_region
      %11 = vsyncadd [#allocation3], 0
      %s12 = sshll.u32 %s0, 4
      %s13 = int_to_ptr.hbm [resolvable:$true] %s12
      %s14 = sshll.u32 [#allocation2], 4
      %s15 = int_to_ptr.vmem [resolvable:$true] %s14
      %20 = dma.hbm_to_vmem [thread:$0]  %s13, 768, %s15, [#allocation3], 256, 256, 16
    $region5: #{_softmax_lastdim_2d.1} parent=1 // pred_fallthru
      _
    // Predicated region
    $region6: #{_softmax_lastdim_2d.1} parent=1 // pred_check
      _
    $region7: #{_softmax_lastdim_2d.1} parent=1 // pred_check_branch
      %22 = sbr.rel (0) target = $region9
    $region8: #{_softmax_lastdim_2d.1} parent=1 // pred_region
      %24 = dma.done [#allocation3], 768
    $region9: #{_softmax_lastdim_2d.1} parent=1 // pred_fallthru
      _
    %v25 = vld [vmem:[#allocation2] sm:$0xff]
    %v26 = vld [vmem:[#allocation2 + $0x8] sm:$0xff]
    %v27 = vld [vmem:[#allocation2 + $0x10] sm:$0xff]
    %v28 = vld [vmem:[#allocation2 + $0x18] sm:$0xff]
    %v29 = vld [vmem:[#allocation2 + $0x20] sm:$0xff]
    %v30 = vld [vmem:[#allocation2 + $0x28] sm:$0xff]
    %v31 = vmax.f32 %v25, %v26
    %32 = vmax.xlane.f32.xlu0 %v31
    %v33 = vpop.xlane.xlu0 %32
    %v34 = vmax.f32 %v27, %v28
    %35 = vmax.xlane.f32.xlu0 %v34
    %v36 = vpop.xlane.xlu0 %35
    %v37 = vmax.f32 %v29, %v30
    %38 = vmax.xlane.f32.xlu0 %v37
    %v39 = vpop.xlane.xlu0 %38
    %v40 = vsub.f32 %v25, %v33
    %v41 = vsub.f32 %v26, %v33
    %v42 = vsub.f32 %v27, %v36
    %v43 = vsub.f32 %v28, %v36
    %v44 = vsub.f32 %v29, %v39
    %v45 = vsub.f32 %v30, %v39
    %v46 = vmul.f32 %v40, 1.442695
    %v47 = vpow.pop %v46
    %v48 = vmul.f32 %v41, 1.442695
    %v49 = vpow.pop %v48
    %v50 = vmul.f32 %v42, 1.442695
    %v51 = vpow.pop %v50
    %v52 = vmul.f32 %v43, 1.442695
    %v53 = vpow.pop %v52
    %v54 = vmul.f32 %v44, 1.442695
    %v55 = vpow.pop %v54
    %v56 = vmul.f32 %v45, 1.442695
    %v57 = vpow.pop %v56
    %v58 = vadd.f32 %v47, %v49
    %59 = vadd.xlane.f32.xlu0 %v58
    %v60 = vpop.xlane.xlu0 %59
    %v61 = vadd.f32 %v51, %v53
    %62 = vadd.xlane.f32.xlu0 %v61
    %v63 = vpop.xlane.xlu0 %62
    %v64 = vadd.f32 %v55, %v57
    %65 = vadd.xlane.f32.xlu0 %v64
    %v66 = vpop.xlane.xlu0 %65
    %v67 = vrcp.pop %v60
    %v68 = vmul.f32 %v60, %v67
    %v69 = vsub.f32 1.0, %v68
    %v70 = vmul.f32 %v67, %v69
    %v71 = vadd.f32 %v67, %v70
    %vm72 = vweird.f32 %v60
    %vm73 = vweird.f32 %v67
    %vm74 = vmor %vm72, %vm73
    %v75 = vsel %vm74, %v67, %v71
    %v76 = vand.u32 2147483647, %v60
    %vm77 = vcmp.eq.f32.partialorder %v76, 8.507059e+37
    %v78 = vand.u32 %v60, 2147483648
    %v79 = vor.u32 1.1754944e-38, %v78
    %v80 = vsel %vm77, %v79, %v75
    %v81 = vmul.f32 %v47, %v80
    %v82 = vmul.f32 %v49, %v80
    %v83 = vrcp.pop %v63
    %v84 = vmul.f32 %v63, %v83
    %v85 = vsub.f32 1.0, %v84
    %v86 = vmul.f32 %v83, %v85
    %v87 = vadd.f32 %v83, %v86
    %vm88 = vweird.f32 %v63
    %vm89 = vweird.f32 %v83
    %vm90 = vmor %vm88, %vm89
    %v91 = vsel %vm90, %v83, %v87
    %v92 = vand.u32 2147483647, %v63
    %vm93 = vcmp.eq.f32.partialorder %v92, 8.507059e+37
    %v94 = vand.u32 %v63, 2147483648
    %v95 = vor.u32 1.1754944e-38, %v94
    %v96 = vsel %vm93, %v95, %v91
    %v97 = vmul.f32 %v51, %v96
    %v98 = vmul.f32 %v53, %v96
    %v99 = vrcp.pop %v66
    %v100 = vmul.f32 %v66, %v99
    %v101 = vsub.f32 1.0, %v100
    %v102 = vmul.f32 %v99, %v101
    %v103 = vadd.f32 %v99, %v102
    %vm104 = vweird.f32 %v66
    %vm105 = vweird.f32 %v99
    %vm106 = vmor %vm104, %vm105
    %v107 = vsel %vm106, %v99, %v103
    %v108 = vand.u32 2147483647, %v66
    %vm109 = vcmp.eq.f32.partialorder %v108, 8.507059e+37
    %v110 = vand.u32 %v66, 2147483648
    %v111 = vor.u32 1.1754944e-38, %v110
    %v112 = vsel %vm109, %v111, %v107
    %v113 = vmul.f32 %v55, %v112
    %v114 = vmul.f32 %v57, %v112
    %115 = vst [vmem:[#allocation5] sm:$0xff] %v81
    %116 = vst [vmem:[#allocation5 + $0x8] sm:$0xff] %v82
    %117 = vst [vmem:[#allocation5 + $0x10] sm:$0xff] %v97
    %118 = vst [vmem:[#allocation5 + $0x18] sm:$0xff] %v98
    %119 = vst [vmem:[#allocation5 + $0x20] sm:$0xff] %v113
    %120 = vst [vmem:[#allocation5 + $0x28] sm:$0xff] %v114
    // Predicated region
    $region10: #{_softmax_lastdim_2d.1} parent=1 // pred_check
      _
    $region11: #{_softmax_lastdim_2d.1} parent=1 // pred_check_branch
      %122 = sbr.rel (0) target = $region13
    $region12: #{_softmax_lastdim_2d.1} parent=1 // pred_region
      %124 = vsyncadd [#allocation4], 0
      %s125 = sshll.u32 [#allocation5], 4
      %s126 = int_to_ptr.vmem [resolvable:$true] %s125
      %s127 = sshll.u32 %s1, 4
      %s128 = int_to_ptr.hbm [resolvable:$true] %s127
      %133 = dma.vmem_to_hbm [thread:$0]  %s126, 768, %s128, [#allocation4], 256, 256, 16
    $region13: #{_softmax_lastdim_2d.1} parent=1 // pred_fallthru
      _
    // Predicated region
    $region14: #{_softmax_lastdim_2d.1} parent=1 // pred_check
      _
    $region15: #{_softmax_lastdim_2d.1} parent=1 // pred_check_branch
      %135 = sbr.rel (0) target = $region17
    $region16: #{_softmax_lastdim_2d.1} parent=1 // pred_region
      %137 = dma.done [#allocation4], 768
    $region17: #{_softmax_lastdim_2d.1} parent=1 // pred_fallthru
      _
    %138 = vsyncpa [#allocation3], 1
    %139 = vsyncpa [#allocation4], 1

</llo_original>
